<compile_context>
chip_gen: v6e
topology: v6e:2x2x1
jax: 0.10.0
libtpu: 0.0.40
codegen_flags: <defaults>
</compile_context>

<pallas_src>
import functools

import jax
import jax.numpy as jnp
from jax.experimental import pallas as pl
from jax.experimental.pallas import tpu as pltpu


def _fused_weight(weight_oihw, compute_dtype):
    """Effective (16*Cin, 4*Cout) weight of fused conv3x3(pad=1) + PixelUnshuffle(2).

    Row index    k = (((a*2 + r)*2 + b)*2 + p) * Cin + cin   (a/r = row tap/phase,
                                                              b/p = col tap/phase)
    Column index n = c*4 + i*2 + j                            (torch PixelUnshuffle order)
    W_eff[k, n]  = w[c, cin, 2a+r-i, 2b+p-j]  if both offsets lie in [0, 2], else 0.
    """
    Cout, Cin = weight_oihw.shape[0], weight_oihw.shape[1]
    zeros = jnp.zeros((Cin, Cout), dtype=weight_oihw.dtype)

    def tap(a, r, b, p):
        rows_i = []
        for i in range(2):
            cols_j = []
            for j in range(2):
                ky, kx = 2 * a + r - i, 2 * b + p - j
                if 0 <= ky <= 2 and 0 <= kx <= 2:
                    cols_j.append(weight_oihw[:, :, ky, kx].T)   # (Cin, Cout)
                else:
                    cols_j.append(zeros)
            rows_i.append(jnp.stack(cols_j, axis=-1))            # (Cin, Cout, 2)   [j]
        return jnp.stack(rows_i, axis=-2)                        # (Cin, Cout, 2, 2) [i, j]

    taps = [tap(a, r, b, p)
            for a in range(2) for r in range(2)
            for b in range(2) for p in range(2)]                 # 16 x (Cin, Cout, 2, 2)
    w_eff = jnp.stack(taps, axis=0)                              # (16, Cin, Cout, 2, 2)
    return w_eff.reshape(16 * Cin, 4 * Cout).astype(compute_dtype)


def _make_fused_kernel(strip_h2, W2, Cin):
    """Kernel body: fused conv3x3 + PixelUnshuffle(2) for one row strip."""

    def kernel(x_ref, w_ref, o_ref):
        # x_ref : (1, H2+1, 2, W2+1, 2*Cin) phase-split zero-padded image (resident per batch)
        # w_ref : (16*Cin, 4*Cout)          effective fused weight
        # o_ref : (1, strip_h2, W2, 4*Cout) fused output strip (lane-dense channels)
        s = pl.program_id(1)
        h0 = pl.multiple_of(s * strip_h2, strip_h2)

        # Single dynamic-slice load of the (strip_h2 + 1)-row window; all tap selection
        # below is static slicing of the loaded value.
        window = x_ref[0, pl.ds(h0, strip_h2 + 1)]              # (strip_h2+1, 2, W2+1, 2*Cin)

        # im2col: 8 (row-tap a, row-phase r, col-tap b) contiguous windows; the column
        # phase p already lives in the minor (2*Cin) dim of the phase-split input.
        taps = []
        for a in range(2):
            for r in range(2):
                rows = window[a:a + strip_h2, r, :, :]          # (strip_h2, W2+1, 2*Cin)
                for b in range(2):
                    taps.append(rows[:, b:b + W2, :])           # (strip_h2, W2, 2*Cin)
        patches = jnp.concatenate(taps, axis=-1)                # (strip_h2, W2, 16*Cin)

        # Single MXU contraction: K = 16*Cin, N = 4*Cout, f32 accumulation.
        out = jnp.einsum("hwk,kn->hwn", patches, w_ref[...],
                         preferred_element_type=jnp.float32)
        o_ref[0] = out.astype(o_ref.dtype)

    return kernel


def _pick_strip_h2(H2, W2, Cin, budget_bytes=2 * 1024 * 1024):
    """Largest divisor of H2 whose f32 im2col strip fits the per-step budget."""
    per_row = max(1, W2 * 16 * Cin * 4)
    target = max(1, min(H2, budget_bytes // per_row))
    best = 1
    for d in range(1, H2 + 1):
        if H2 % d == 0 and d <= target:
            best = d
    return best


@functools.partial(jax.jit, static_argnames=("strip_h2", "compute_dtype"))
def downsample_forward(x_nchw, weight_oihw, *, strip_h2=None, compute_dtype=jnp.float32):
    """Restormer Downsample forward (NCHW in, NCHW out, matching the PyTorch module).

    compute_dtype=jnp.bfloat16 halves HBM/VMEM/DMA traffic for this memory-bound op
    (accumulation stays f32); the default f32 keeps bit-level closeness to the reference.
    """
    B, Cin, H, W = x_nchw.shape
    Cout = weight_oihw.shape[0]
    assert weight_oihw.shape == (Cout, Cin, 3, 3)
    assert H % 2 == 0 and W % 2 == 0, "PixelUnshuffle(2) needs even spatial dims"
    H2, W2 = H // 2, W // 2

    if strip_h2 is None:
        strip_h2 = _pick_strip_h2(H2, W2, Cin)
    assert H2 % strip_h2 == 0, "strip_h2 must divide H//2"
    n_strips = H2 // strip_h2

    # Single input prep pass: NCHW -> NHWC + 1px zero halo (+ cast); XLA fuses these,
    # and the phase-split reshape below is a free row-major view (no data movement).
    # TODO(synk): in an NHWC end-to-end Restormer pipeline this transpose pass vanishes.
    x_nhwc = jnp.transpose(x_nchw, (0, 2, 3, 1)).astype(compute_dtype)
    x_pad = jnp.pad(x_nhwc, ((0, 0), (1, 1), (1, 1), (0, 0)))
    x_ps = x_pad.reshape(B, H2 + 1, 2, W2 + 1, 2 * Cin)

    w_eff = _fused_weight(weight_oihw, compute_dtype)             # (16*Cin, 4*Cout)

    out_dtype = x_nchw.dtype
    itemsize = jnp.dtype(compute_dtype).itemsize
    cost = pl.CostEstimate(
        flops=2 * B * H2 * W2 * (16 * Cin) * (4 * Cout),
        transcendentals=0,
        bytes_accessed=(x_ps.size * itemsize + w_eff.size * itemsize
                        + B * H2 * W2 * 4 * Cout * jnp.dtype(out_dtype).itemsize),
    )

    y_nhwc = pl.pallas_call(
        _make_fused_kernel(strip_h2, W2, Cin),
        out_shape=jax.ShapeDtypeStruct((B, H2, W2, 4 * Cout), out_dtype),
        grid_spec=pltpu.PrefetchScalarGridSpec(
            num_scalar_prefetch=0,
            grid=(B, n_strips),
            in_specs=[
                # Whole phase-split image per batch element; index_map ignores the strip
                # axis so the block stays resident in VMEM across strips of one image.
                pl.BlockSpec((1, H2 + 1, 2, W2 + 1, 2 * Cin),
                             lambda b, s: (b, 0, 0, 0, 0)),
                pl.BlockSpec((16 * Cin, 4 * Cout), lambda b, s: (0, 0)),
            ],
            out_specs=pl.BlockSpec((1, strip_h2, W2, 4 * Cout),
                                   lambda b, s: (b, s, 0, 0)),
        ),
        compiler_params=pltpu.CompilerParams(
            dimension_semantics=("parallel", "parallel")),
        cost_estimate=cost,
    )(x_ps, w_eff)

    # Channels are already in torch PixelUnshuffle order (c*4 + i*2 + j); only the
    # NHWC -> NCHW layout change remains (required by the PyTorch-style interface).
    return jnp.transpose(y_nhwc, (0, 3, 1, 2))


def _pixel_unshuffle_nchw(x_nchw, r=2):
    """torch.nn.PixelUnshuffle semantics on NCHW input (reference-check glue only)."""
    B, C, H, W = x_nchw.shape
    x = x_nchw.reshape(B, C, H // r, r, W // r, r)
    x = jnp.transpose(x, (0, 1, 3, 5, 2, 4))
    return x.reshape(B, C * r * r, H // r, W // r)


if __name__ == "__main__":
    B, n_feat, H, W = 2, 4, 16, 16

    key = jax.random.PRNGKey(0)
    kx, kw = jax.random.split(key)
    x = jax.random.normal(kx, (B, n_feat, H, W), dtype=jnp.float32)
    # Shape matches nn.Conv2d(n_feat, n_feat//2, 3, padding=1, bias=False).weight
    w = jax.random.normal(kw, (n_feat // 2, n_feat, 3, 3), dtype=jnp.float32) * 0.1

    out = downsample_forward(x, w, strip_h2=4)     # 2 row strips -> grid (B, 2)
    out = jax.block_until_ready(out)

    # Self-check against a pure-XLA reference (conv + pixel-unshuffle).
    ref_conv = jax.lax.conv_general_dilated(
        x, w, window_strides=(1, 1), padding=((1, 1), (1, 1)),
        dimension_numbers=("NCHW", "OIHW", "NCHW"))
    ref = _pixel_unshuffle_nchw(ref_conv, r=2)

    assert out.shape == (B, 2 * n_feat, H // 2, W // 2), out.shape
    assert jnp.allclose(out, ref, atol=1e-4, rtol=1e-4), float(jnp.max(jnp.abs(out - ref)))

    print("KERNEL_OK")
</pallas_src>

<mosaic_0001>
module attributes {stable_mosaic.version = 11 : i64} {
  func.func @kernel(%arg0: i32, %arg1: i32, %arg2: memref<1x9x2x9x8xf32, #tpu.memory_space<vmem>>, %arg3: memref<64x8xf32, #tpu.memory_space<vmem>>, %arg4: memref<1x4x8x8xf32, #tpu.memory_space<vmem>>) attributes {dimension_semantics = [#tpu.dimension_semantics<parallel>, #tpu.dimension_semantics<parallel>], iteration_bounds = array<i64: 2, 2>, scalar_prefetch = 0 : i64, scratch_operands = 0 : i64, tpu.core_type = #tpu.core_type<tc>, window_params = [{transform_indices = @transform_0, window_bounds = array<i64: 1, 9, 2, 9, 8>}, {pipeline_mode = #tpu.pipeline_mode<synchronous>, transform_indices = @transform_1, window_bounds = array<i64: 64, 8>}, {transform_indices = @transform_2, window_bounds = array<i64: 1, 4, 8, 8>}]} {
    %c4_i32 = arith.constant 4 : i32
    %0 = arith.muli %arg1, %c4_i32 : i32
    %1 = tpu.assume_multiple %0, 4 : i32
    %c0 = arith.constant 0 : index
    %2 = arith.index_cast %1 : i32 to index
    %c0_0 = arith.constant 0 : index
    %c0_1 = arith.constant 0 : index
    %c0_2 = arith.constant 0 : index
    %3 = vector.load %arg2[%c0, %2, %c0_0, %c0_1, %c0_2] : memref<1x9x2x9x8xf32, #tpu.memory_space<vmem>>, vector<1x5x2x9x8xf32>
    %4 = vector.shape_cast %3 : vector<1x5x2x9x8xf32> to vector<5x2x9x8xf32>
    %5 = vector.extract_strided_slice %4 {offsets = [0, 0, 0, 0], sizes = [4, 1, 9, 8], strides = [1, 1, 1, 1]} : vector<5x2x9x8xf32> to vector<4x1x9x8xf32>
    %6 = vector.shape_cast %5 : vector<4x1x9x8xf32> to vector<4x9x8xf32>
    %7 = vector.extract_strided_slice %6 {offsets = [0, 0, 0], sizes = [4, 8, 8], strides = [1, 1, 1]} : vector<4x9x8xf32> to vector<4x8x8xf32>
    %8 = vector.extract_strided_slice %6 {offsets = [0, 1, 0], sizes = [4, 8, 8], strides = [1, 1, 1]} : vector<4x9x8xf32> to vector<4x8x8xf32>
    %9 = vector.extract_strided_slice %4 {offsets = [0, 1, 0, 0], sizes = [4, 1, 9, 8], strides = [1, 1, 1, 1]} : vector<5x2x9x8xf32> to vector<4x1x9x8xf32>
    %10 = vector.shape_cast %9 : vector<4x1x9x8xf32> to vector<4x9x8xf32>
    %11 = vector.extract_strided_slice %10 {offsets = [0, 0, 0], sizes = [4, 8, 8], strides = [1, 1, 1]} : vector<4x9x8xf32> to vector<4x8x8xf32>
    %12 = vector.extract_strided_slice %10 {offsets = [0, 1, 0], sizes = [4, 8, 8], strides = [1, 1, 1]} : vector<4x9x8xf32> to vector<4x8x8xf32>
    %13 = vector.extract_strided_slice %4 {offsets = [1, 0, 0, 0], sizes = [4, 1, 9, 8], strides = [1, 1, 1, 1]} : vector<5x2x9x8xf32> to vector<4x1x9x8xf32>
    %14 = vector.shape_cast %13 : vector<4x1x9x8xf32> to vector<4x9x8xf32>
    %15 = vector.extract_strided_slice %14 {offsets = [0, 0, 0], sizes = [4, 8, 8], strides = [1, 1, 1]} : vector<4x9x8xf32> to vector<4x8x8xf32>
    %16 = vector.extract_strided_slice %14 {offsets = [0, 1, 0], sizes = [4, 8, 8], strides = [1, 1, 1]} : vector<4x9x8xf32> to vector<4x8x8xf32>
    %17 = vector.extract_strided_slice %4 {offsets = [1, 1, 0, 0], sizes = [4, 1, 9, 8], strides = [1, 1, 1, 1]} : vector<5x2x9x8xf32> to vector<4x1x9x8xf32>
    %18 = vector.shape_cast %17 : vector<4x1x9x8xf32> to vector<4x9x8xf32>
    %19 = vector.extract_strided_slice %18 {offsets = [0, 0, 0], sizes = [4, 8, 8], strides = [1, 1, 1]} : vector<4x9x8xf32> to vector<4x8x8xf32>
    %20 = vector.extract_strided_slice %18 {offsets = [0, 1, 0], sizes = [4, 8, 8], strides = [1, 1, 1]} : vector<4x9x8xf32> to vector<4x8x8xf32>
    %21 = tpu.concatenate %7, %8, %11, %12, %15, %16, %19, %20 in 2 : vector<4x8x8xf32>, vector<4x8x8xf32>, vector<4x8x8xf32>, vector<4x8x8xf32>, vector<4x8x8xf32>, vector<4x8x8xf32>, vector<4x8x8xf32>, vector<4x8x8xf32> -> vector<4x8x64xf32>
    %c0_3 = arith.constant 0 : index
    %c0_4 = arith.constant 0 : index
    %22 = vector.load %arg3[%c0_3, %c0_4] : memref<64x8xf32, #tpu.memory_space<vmem>>, vector<64x8xf32>
    "tpu.trace_start"() <{level = 10 : i32, message = "hwk,kn->hwn"}> : () -> ()
    %cst = arith.constant dense<0.000000e+00> : vector<4x8x8xf32>
    %23 = tpu.matmul %21, %22, %cst {dimension_numbers = #tpu.dot_dimension_numbers<[2], [0], [0, 1], [1], [0, 0, 0, 1, 1, 1], [], []>} : vector<4x8x64xf32>, vector<64x8xf32>, vector<4x8x8xf32> -> vector<4x8x8xf32>
    "tpu.trace_stop"() : () -> ()
    %c0_5 = arith.constant 0 : index
    %c0_6 = arith.constant 0 : index
    %c0_7 = arith.constant 0 : index
    %c0_8 = arith.constant 0 : index
    %24 = vector.load %arg4[%c0_5, %c0_6, %c0_7, %c0_8] : memref<1x4x8x8xf32, #tpu.memory_space<vmem>>, vector<1x4x8x8xf32>
    %25 = vector.shape_cast %24 : vector<1x4x8x8xf32> to vector<4x8x8xf32>
    %26 = vector.shape_cast %23 : vector<4x8x8xf32> to vector<1x4x8x8xf32>
    tpu.vector_store %arg4[%c0_5, %c0_6, %c0_7, %c0_8], %26 {strides = array<i32>} : memref<1x4x8x8xf32, #tpu.memory_space<vmem>>, vector<1x4x8x8xf32>,
    return
  }
  func.func @transform_0(%arg0: i32, %arg1: i32) -> (i32, i32, i32, i32, i32) {
    %c0_i32 = arith.constant 0 : i32
    %c0_i32_0 = arith.constant 0 : i32
    %c0_i32_1 = arith.constant 0 : i32
    %c0_i32_2 = arith.constant 0 : i32
    %c0_i32_3 = arith.constant 0 : i32
    return %arg0, %c0_i32, %c0_i32_0, %c0_i32_1, %c0_i32_2 : i32, i32, i32, i32, i32
  }
  func.func @transform_1(%arg0: i32, %arg1: i32) -> (i32, i32) {
    %c0_i32 = arith.constant 0 : i32
    %c0_i32_0 = arith.constant 0 : i32
    %c0_i32_1 = arith.constant 0 : i32
    return %c0_i32, %c0_i32_0 : i32, i32
  }
  func.func @transform_2(%arg0: i32, %arg1: i32) -> (i32, i32, i32, i32) {
    %c0_i32 = arith.constant 0 : i32
    %c0_i32_0 = arith.constant 0 : i32
    %c0_i32_1 = arith.constant 0 : i32
    return %arg0, %arg1, %c0_i32, %c0_i32_0 : i32, i32, i32, i32
  }
}

</mosaic_0001>

<llo_original>
// kernel: downsample_forward.1
$region0: #{downsample_forward.1}
  #allocation0 [shape = 'u32[]', space=smem, size = 0x4, offset = 0x4, fixed_abs, tag = 'smem constant byte address 0x4 - core index']
  #allocation1 [shape = 'u32[144,128]{1,0:T(1,128)}', space=vmem, size = 0x12000, scoped, tag = 'internal scratch']
  %s0 = inlined_call_operand.vmem [shape: f32[2,9,2,9,8], index: 0, kind: input, shape index: {}]
  %s1 = inlined_call_operand.vmem [shape: f32[64,8], index: 1, kind: input, shape index: {}]
  %s2 = inlined_call_operand.vmem [shape: f32[2,8,8,8], index: 2, kind: output, shape index: {}]
  %s3 = sld [smem:[#allocation0]]
  $region41: #{downsample_forward.1} parent=0
    _
  %s5 = ssub.s32 1, %s3
  %s6 = scalar_select 0, %s5, %s3
  loop: start=0, step=1, limit=6
  $region2: #{downsample_forward.1} parent=0 // loop_pre_header
    _
  $region3: #{downsample_forward.1} parent=0 // loop_header
    %s8 = sphi 0, %s12
    %p9 = scmp.ge.s32.totalorder %s8, 6
    %s15 = sphi 0, %s27
    %s16 = sphi 0, %s23
    %s17 = sphi 0, %s15
    %s18 = sphi 0, %s16
    %s19 = sphi 0, %s17
    %s20 = sphi 0, %s18
    %s30 = sphi 0, %s32
    %s33 = sphi 0, %s30
    %s34 = sphi 0, %s33
    %s50 = sphi 0, %s34
    %s54 = sphi 0, %s54
    %s56 = sphi 0, %s54
    %s57 = sphi 0, %s56
    %s71 = sphi 0, %s57
    %s79 = sphi 0, %s81
    %s82 = sphi 0, %s79
    %s83 = sphi 0, %s82
    %s99 = sphi 0, %s83
  $region4: #{downsample_forward.1} parent=0 // loop_header_branch
    %11 = sbr.rel (%p9) target = $region8
  $region5: #{downsample_forward.1} parent=0 // loop_body
    %s13 = ssub.s32 %s8, 1
    %s14 = ssub.s32 %s8, 2
    %s21 = sadd.s32 1, %s16
    %p22 = scmp.ge.s32.totalorder %s21, 2
    %s23 = scalar_select %p22, 0, %s21
    %s24 = sadd.s32 1, %s15
    %s25 = scalar_select %p22, %s24, %s15
    %p26 = scmp.ge.s32.totalorder %s25, 2
    %s27 = scalar_select %p26, 0, %s25
    %s28 = ssub.s32 %s15, %s27
    %p29 = scmp.eq.s32.totalorder %s28, 0
    %s31 = sadd.s32 %s30, 1
    %s32 = scalar_select %p29, %s30, %s31
    %p35 = pneg %p29
    %p36 = scmp.eq.s32.totalorder %s8, 3
    %p37 = por %p35, %p36
    %p38 = scmp.ne.s32.totalorder %s30, %s33
    %p39 = scmp.eq.s32.totalorder %s8, 0
    %p40 = por %p38, %p39
    %p41 = scmp.ne.s32.totalorder %s30, %s33
    %p42 = scmp.eq.s32.totalorder %s13, 3
    %p43 = por %p41, %p42
    %p44 = scmp.ne.s32.totalorder %s33, %s34
    %p45 = scmp.eq.s32.totalorder %s13, 0
    %p46 = por %p44, %p45
    %p47 = scmp.ne.s32.totalorder %s33, %s34
    %p48 = scmp.eq.s32.totalorder %s14, 3
    %p49 = por %p47, %p48
    %p51 = scmp.ne.s32.totalorder %s34, %s50
    %p52 = scmp.eq.s32.totalorder %s14, 0
    %p53 = por %p51, %p52
    %s55 = sadd.s32 %s54, 1
    %p58 = scmp.eq.s32.totalorder %s8, 3
    %p59 = scmp.ne.s32.totalorder %s54, %s56
    %p60 = scmp.eq.s32.totalorder %s8, 0
    %p61 = por %p59, %p60
    %p62 = scmp.ne.s32.totalorder %s54, %s56
    %p63 = scmp.eq.s32.totalorder %s13, 3
    %p64 = por %p62, %p63
    %p65 = scmp.ne.s32.totalorder %s56, %s57
    %p66 = scmp.eq.s32.totalorder %s13, 0
    %p67 = por %p65, %p66
    %p68 = scmp.ne.s32.totalorder %s56, %s57
    %p69 = scmp.eq.s32.totalorder %s14, 3
    %p70 = por %p68, %p69
    %p72 = scmp.ne.s32.totalorder %s57, %s71
    %p73 = scmp.eq.s32.totalorder %s14, 0
    %p74 = por %p72, %p73
    %s75 = ssub.s32 %s15, %s27
    %s76 = ssub.s32 %s16, %s23
    %s77 = sor.u32 %s75, %s76
    %p78 = scmp.eq.s32.totalorder %s77, 0
    %s80 = sadd.s32 %s79, 1
    %s81 = scalar_select %p78, %s79, %s80
    %p84 = pneg %p78
    %p85 = scmp.eq.s32.totalorder %s8, 3
    %p86 = por %p84, %p85
    %p87 = scmp.ne.s32.totalorder %s79, %s82
    %p88 = scmp.eq.s32.totalorder %s8, 0
    %p89 = por %p87, %p88
    %p90 = scmp.ne.s32.totalorder %s79, %s82
    %p91 = scmp.eq.s32.totalorder %s13, 3
    %p92 = por %p90, %p91
    %p93 = scmp.ne.s32.totalorder %s82, %s83
    %p94 = scmp.eq.s32.totalorder %s13, 0
    %p95 = por %p93, %p94
    %p96 = scmp.ne.s32.totalorder %s82, %s83
    %p97 = scmp.eq.s32.totalorder %s14, 3
    %p98 = por %p96, %p97
    %p100 = scmp.ne.s32.totalorder %s83, %s99
    %p101 = scmp.eq.s32.totalorder %s14, 0
    %p102 = por %p100, %p101
    %p103 = scmp.le.s32.totalorder 1, %s8
    %p104 = scmp.lt.s32.totalorder %s8, 5
    %p105 = pnand %p103, %p104
    %p106 = pneg %p105
    // Predicated region
    $region9: #{downsample_forward.1} parent=5 // pred_check
      _
    $region10: #{downsample_forward.1} parent=5 // pred_check_branch
      %108 = sbr.rel (%p105) target = $region12
    $region11: #{downsample_forward.1} parent=5 // pred_region
      %s109 = ssub.s32 %s8, 1
      // Predicated region
      $region13: #{downsample_forward.1} parent=11 // pred_check
        %p110 = pneg %p67
      $region14: #{downsample_forward.1} parent=11 // pred_check_branch
        %112 = sbr.rel (%p110) target = $region16
      $region15: #{downsample_forward.1} parent=11 // pred_region
        _
      $region16: #{downsample_forward.1} parent=11 // pred_fallthru
        _
    $region12: #{downsample_forward.1} parent=5 // pred_fallthru
      _
    %p113 = scmp.lt.s32.totalorder %s8, 4
    // Predicated region
    $region17: #{downsample_forward.1} parent=5 // pred_check
      %p114 = pneg %p113
    $region18: #{downsample_forward.1} parent=5 // pred_check_branch
      %116 = sbr.rel (%p114) target = $region20
    $region19: #{downsample_forward.1} parent=5 // pred_region
      // Predicated region
      $region21: #{downsample_forward.1} parent=19 // pred_check
        %p117 = pneg %p40
      $region22: #{downsample_forward.1} parent=19 // pred_check_branch
        %119 = sbr.rel (%p117) target = $region24
      $region23: #{downsample_forward.1} parent=19 // pred_region
        %p120 = scmp.lt.s32.totalorder %s15, 1
        %s121 = scalar_select %p120, %s15, 1
        %s122 = smul.addr %s121, 36
        %s123 = smul.addr %s122, 8
        %s124 = scalar_lea.vmem %s0, %s123
      $region24: #{downsample_forward.1} parent=19 // pred_fallthru
        _
    $region20: #{downsample_forward.1} parent=5 // pred_fallthru
      _
    %p125 = scmp.le.s32.totalorder 1, %s8
    %p126 = scmp.lt.s32.totalorder %s8, 5
    %p127 = pnand %p125, %p126
    %p128 = pneg %p127
    // Predicated region
    $region25: #{downsample_forward.1} parent=5 // pred_check
      _
    $region26: #{downsample_forward.1} parent=5 // pred_check_branch
      %130 = sbr.rel (%p127) target = $region28
    $region27: #{downsample_forward.1} parent=5 // pred_region
      %s131 = ssub.s32 %s8, 1
      %p132 = scmp.lt.s32.totalorder %s17, 1
      %s133 = scalar_select %p132, %s17, 1
      %s134 = smul.addr %s133, 36
      %s135 = smul.addr %s134, 8
      %s136 = scalar_lea.vmem %s0, %s135
      %p137 = pneg %p46
      %p138 = pneg %p43
      %p139 = pneg %p67
      %p140 = pneg %p64
      %p141 = pneg %p95
      %p142 = pneg %p92
      %s143 = smul.u32 4, %s18
      %p144 = scmp.lt.s32.totalorder %s17, 1
      %s145 = scalar_select %p144, %s17, 1
      %p146 = scmp.lt.s32.totalorder %s143, 7
      %s147 = scalar_select %p146, %s143, 7
      %s148 = smul.addr %s145, 8
      %s149 = sadd.s32 %s147, %s148
      %s150 = smul.addr %s149, 8
      %s151 = scalar_lea.vmem %s2, %s150
      %p152 = scmp.lt.s32.totalorder %s17, 1
      %s153 = scalar_select %p152, %s17, 1
      %s154 = smul.addr %s153, 36
      %s155 = smul.addr %s154, 8
      %s156 = scalar_lea.vmem %s0, %s155
      %s157 = smul.u32 4, %s18
      %p158 = scmp.lt.s32.totalorder %s17, 1
      %s159 = scalar_select %p158, %s17, 1
      %p160 = scmp.lt.s32.totalorder %s157, 7
      %s161 = scalar_select %p160, %s157, 7
      %s162 = smul.addr %s159, 8
      %s163 = sadd.s32 %s161, %s162
      %s164 = smul.addr %s163, 8
      %s165 = scalar_lea.vmem %s2, %s164
      %s166 = smul.u32 4, %s18
      %s167 = smul.u32 %s18, 4
      %s168 = smul.u32 %s167, 32
      %s169 = scalar_lea.vmem %s156, %s168
      %v170 = vld [vmem:[%s169] sm:$0xff]
      %v171 = vld [vmem:[%s169 + $0x8] sm:$0x1]
      %v172 = vld [vmem:[%s169 + $0x10] sm:$0xff]
      %v173 = vld [vmem:[%s169 + $0x18] sm:$0x1]
      %v174 = vld [vmem:[%s169 + $0x20] sm:$0xff]
      %v175 = vld [vmem:[%s169 + $0x28] sm:$0x1]
      %v176 = vld [vmem:[%s169 + $0x30] sm:$0xff]
      %v177 = vld [vmem:[%s169 + $0x38] sm:$0x1]
      %v178 = vld [vmem:[%s169 + $0x40] sm:$0xff]
      %v179 = vld [vmem:[%s169 + $0x48] sm:$0x1]
      %v180 = vld [vmem:[%s169 + $0x50] sm:$0xff]
      %v181 = vld [vmem:[%s169 + $0x58] sm:$0x1]
      %v182 = vld [vmem:[%s169 + $0x60] sm:$0xff]
      %v183 = vld [vmem:[%s169 + $0x68] sm:$0x1]
      %v184 = vld [vmem:[%s169 + $0x70] sm:$0xff]
      %v185 = vld [vmem:[%s169 + $0x78] sm:$0x1]
      %v186 = vld [vmem:[%s169 + $0x80] sm:$0xff]
      %v187 = vld [vmem:[%s169 + $0x88] sm:$0x1]
      %v188 = vld [vmem:[%s169 + $0x90] sm:$0xff]
      %v189 = vld [vmem:[%s169 + $0x98] sm:$0x1]
      %vm198 = vcmask 1046528
      %v199 = vrot.slane %v170, 1
      %v200 = vrot.slane %v171, 1
      %v201 = vsel %vm198, %v199, %v200
      %v202 = vrot.slane %v174, 1
      %v203 = vrot.slane %v175, 1
      %v204 = vsel %vm198, %v202, %v203
      %v205 = vrot.slane %v178, 1
      %v206 = vrot.slane %v179, 1
      %v207 = vsel %vm198, %v205, %v206
      %v208 = vrot.slane %v182, 1
      %v209 = vrot.slane %v183, 1
      %v210 = vsel %vm198, %v208, %v209
      %211 = vrot.lane.b32.xlu0 %v201, 8
      %v212 = vpop.permute.xlu0 %211
      %213 = vrot.lane.b32.xlu0 %v204, 8
      %v214 = vpop.permute.xlu0 %213
      %215 = vrot.lane.b32.xlu0 %v207, 8
      %v216 = vpop.permute.xlu0 %215
      %217 = vrot.lane.b32.xlu0 %v210, 8
      %v218 = vpop.permute.xlu0 %217
      %227 = vrot.lane.b32.xlu0 %v172, 16
      %v228 = vpop.permute.xlu0 %227
      %229 = vrot.lane.b32.xlu0 %v176, 16
      %v230 = vpop.permute.xlu0 %229
      %231 = vrot.lane.b32.xlu0 %v180, 16
      %v232 = vpop.permute.xlu0 %231
      %233 = vrot.lane.b32.xlu0 %v184, 16
      %v234 = vpop.permute.xlu0 %233
      %v243 = vrot.slane %v172, 1
      %v244 = vrot.slane %v173, 1
      %v245 = vsel %vm198, %v243, %v244
      %v246 = vrot.slane %v176, 1
      %v247 = vrot.slane %v177, 1
      %v248 = vsel %vm198, %v246, %v247
      %v249 = vrot.slane %v180, 1
      %v250 = vrot.slane %v181, 1
      %v251 = vsel %vm198, %v249, %v250
      %v252 = vrot.slane %v184, 1
      %v253 = vrot.slane %v185, 1
      %v254 = vsel %vm198, %v252, %v253
      %255 = vrot.lane.b32.xlu0 %v245, 24
      %v256 = vpop.permute.xlu0 %255
      %257 = vrot.lane.b32.xlu0 %v248, 24
      %v258 = vpop.permute.xlu0 %257
      %259 = vrot.lane.b32.xlu0 %v251, 24
      %v260 = vpop.permute.xlu0 %259
      %261 = vrot.lane.b32.xlu0 %v254, 24
      %v262 = vpop.permute.xlu0 %261
      %268 = vrot.lane.b32.xlu0 %v174, 32
      %v269 = vpop.permute.xlu0 %268
      %270 = vrot.lane.b32.xlu0 %v178, 32
      %v271 = vpop.permute.xlu0 %270
      %272 = vrot.lane.b32.xlu0 %v182, 32
      %v273 = vpop.permute.xlu0 %272
      %274 = vrot.lane.b32.xlu0 %v186, 32
      %v275 = vpop.permute.xlu0 %274
      %v281 = vrot.slane %v186, 1
      %v282 = vrot.slane %v187, 1
      %v283 = vsel %vm198, %v281, %v282
      %284 = vrot.lane.b32.xlu0 %v204, 40
      %v285 = vpop.permute.xlu0 %284
      %286 = vrot.lane.b32.xlu0 %v207, 40
      %v287 = vpop.permute.xlu0 %286
      %288 = vrot.lane.b32.xlu0 %v210, 40
      %v289 = vpop.permute.xlu0 %288
      %290 = vrot.lane.b32.xlu0 %v283, 40
      %v291 = vpop.permute.xlu0 %290
      %297 = vrot.lane.b32.xlu0 %v176, 48
      %v298 = vpop.permute.xlu0 %297
      %299 = vrot.lane.b32.xlu0 %v180, 48
      %v300 = vpop.permute.xlu0 %299
      %301 = vrot.lane.b32.xlu0 %v184, 48
      %v302 = vpop.permute.xlu0 %301
      %303 = vrot.lane.b32.xlu0 %v188, 48
      %v304 = vpop.permute.xlu0 %303
      %v310 = vrot.slane %v188, 1
      %v311 = vrot.slane %v189, 1
      %v312 = vsel %vm198, %v310, %v311
      %313 = vrot.lane.b32.xlu0 %v248, 56
      %v314 = vpop.permute.xlu0 %313
      %315 = vrot.lane.b32.xlu0 %v251, 56
      %v316 = vpop.permute.xlu0 %315
      %317 = vrot.lane.b32.xlu0 %v254, 56
      %v318 = vpop.permute.xlu0 %317
      %319 = vrot.lane.b32.xlu0 %v312, 56
      %v320 = vpop.permute.xlu0 %319
      %vm325 = vcmask 64512
      %v326 = vsel %vm325, %v170, %v212
      %v327 = vsel %vm325, %v174, %v214
      %v328 = vsel %vm325, %v178, %v216
      %v329 = vsel %vm325, %v182, %v218
      %vm330 = vcmask 130048
      %v331 = vsel %vm330, %v326, %v228
      %v332 = vsel %vm330, %v327, %v230
      %v333 = vsel %vm330, %v328, %v232
      %v334 = vsel %vm330, %v329, %v234
      %vm335 = vcmask 195584
      %v336 = vsel %vm335, %v331, %v256
      %v337 = vsel %vm335, %v332, %v258
      %v338 = vsel %vm335, %v333, %v260
      %v339 = vsel %vm335, %v334, %v262
      %vm340 = vcmask 261120
      %v341 = vsel %vm340, %v336, %v269
      %v342 = vsel %vm340, %v337, %v271
      %v343 = vsel %vm340, %v338, %v273
      %v344 = vsel %vm340, %v339, %v275
      %vm345 = vcmask 326656
      %v346 = vsel %vm345, %v341, %v285
      %v347 = vsel %vm345, %v342, %v287
      %v348 = vsel %vm345, %v343, %v289
      %v349 = vsel %vm345, %v344, %v291
      %vm350 = vcmask 392192
      %v351 = vsel %vm350, %v346, %v298
      %v352 = vsel %vm350, %v347, %v300
      %v353 = vsel %vm350, %v348, %v302
      %v354 = vsel %vm350, %v349, %v304
      %vm355 = vcmask 457728
      %v356 = vsel %vm355, %v351, %v314
      %v357 = vsel %vm355, %v352, %v316
      %v358 = vsel %vm355, %v353, %v318
      %v359 = vsel %vm355, %v354, %v320
      %v360 = vld [vmem:[%s1] sm:$0xff]
      %v361 = vld [vmem:[%s1 + $0x8] sm:$0xff]
      %v362 = vld [vmem:[%s1 + $0x10] sm:$0xff]
      %v363 = vld [vmem:[%s1 + $0x18] sm:$0xff]
      %v364 = vld [vmem:[%s1 + $0x20] sm:$0xff]
      %v365 = vld [vmem:[%s1 + $0x28] sm:$0xff]
      %v366 = vld [vmem:[%s1 + $0x30] sm:$0xff]
      %v367 = vld [vmem:[%s1 + $0x38] sm:$0xff]
      %vm368 = vcmask 523264
      %v370 = vsel %vm368, %v356, 0
      %v373 = vsel %vm368, %v357, 0
      %v376 = vsel %vm368, %v358, 0
      %v379 = vsel %vm368, %v359, 0
      %381 = vmatprep.subr.mxu0 0.0
      %382 = vmatpush1.msra.mxu0 0.0
      %383 = vmatprep.subr.mxu0 0.0
      %384 = vmatpush1.msra.mxu0 0.0
      %385 = vmatprep.subr.mxu0 0.0
      %386 = vmatpush1.msra.mxu0 0.0
      %387 = vmatprep.subr.mxu0 0.0
      %388 = vmatpush1.msra.mxu0 0.0
      %389 = vmatprep.subr.mxu0 0.0
      %390 = vmatpush1.msra.mxu0 0.0
      %391 = vmatprep.subr.mxu0 0.0
      %392 = vmatpush1.msra.mxu0 0.0
      %393 = vmatprep.subr.mxu0 0.0
      %394 = vmatpush1.msra.mxu0 0.0
      %395 = vmatprep.subr.mxu0 0.0
      %396 = vmatpush1.msra.mxu0 0.0
      %397 = vmatprep.subr.mxu0 0.0
      %398 = vmatpush1.msra.mxu0 %v367
      %399 = vmatprep.subr.mxu0 0.0
      %400 = vmatpush1.msra.mxu0 %v366
      %401 = vmatprep.subr.mxu0 0.0
      %402 = vmatpush1.msra.mxu0 %v365
      %403 = vmatprep.subr.mxu0 0.0
      %404 = vmatpush1.msra.mxu0 %v364
      %405 = vmatprep.subr.mxu0 0.0
      %406 = vmatpush1.msra.mxu0 %v363
      %407 = vmatprep.subr.mxu0 0.0
      %408 = vmatpush1.msra.mxu0 %v362
      %409 = vmatprep.subr.mxu0 0.0
      %410 = vmatpush1.msra.mxu0 %v361
      %411 = vmatprep.subr.mxu0 0.0
      %412 = vmatpush1.msra.mxu0 %v360
      %413 = vmatprep.subr.mxu0 0.0
      %414 = vmatpush2.msra.mxu0 0.0
      %415 = vmatprep.subr.mxu0 0.0
      %416 = vmatpush2.msra.mxu0 0.0
      %417 = vmatprep.subr.mxu0 0.0
      %418 = vmatpush2.msra.mxu0 0.0
      %419 = vmatprep.subr.mxu0 0.0
      %420 = vmatpush2.msra.mxu0 0.0
      %421 = vmatprep.subr.mxu0 0.0
      %422 = vmatpush2.msra.mxu0 0.0
      %423 = vmatprep.subr.mxu0 0.0
      %424 = vmatpush2.msra.mxu0 0.0
      %425 = vmatprep.subr.mxu0 0.0
      %426 = vmatpush2.msra.mxu0 0.0
      %427 = vmatprep.subr.mxu0 0.0
      %428 = vmatpush2.msra.mxu0 0.0
      %429 = vmatprep.subr.mxu0 0.0
      %430 = vmatpush2.msra.mxu0 0.0
      %431 = vmatprep.subr.mxu0 0.0
      %432 = vmatpush2.msra.mxu0 0.0
      %433 = vmatprep.subr.mxu0 0.0
      %434 = vmatpush2.msra.mxu0 0.0
      %435 = vmatprep.subr.mxu0 0.0
      %436 = vmatpush2.msra.mxu0 0.0
      %437 = vmatprep.subr.mxu0 0.0
      %438 = vmatpush2.msra.mxu0 0.0
      %439 = vmatprep.subr.mxu0 0.0
      %440 = vmatpush2.msra.mxu0 0.0
      %441 = vmatprep.subr.mxu0 0.0
      %442 = vmatpush2.msra.mxu0 0.0
      %443 = vmatprep.subr.mxu0 0.0
      %444 = vmatpush2.msra.mxu0 0.0
      %445 = vmatprep.mubr.f32.mxu0 0.0
      %446 = vmatmul.mubr.f32.gmra.mxu0 %v370
      %v447 = vpop.f32.mrf.mxu0
      %v448 = vadd.f32 0.0, %v447
      %v449 = vpop.f32.mrf.mxu0
      %450 = vmatprep.mubr.f32.mxu0 0.0
      %451 = vmatmul.mubr.f32.gmra.mxu0 %v373
      %v452 = vpop.f32.mrf.mxu0
      %v453 = vadd.f32 0.0, %v452
      %v454 = vpop.f32.mrf.mxu0
      %455 = vmatprep.mubr.f32.mxu0 0.0
      %456 = vmatmul.mubr.f32.gmra.mxu0 %v376
      %v457 = vpop.f32.mrf.mxu0
      %v458 = vadd.f32 0.0, %v457
      %v459 = vpop.f32.mrf.mxu0
      %460 = vmatprep.mubr.f32.mxu0 0.0
      %461 = vmatmul.mubr.f32.gmra.mxu0 %v379
      %v462 = vpop.f32.mrf.mxu0
      %v463 = vadd.f32 0.0, %v462
      %v464 = vpop.f32.mrf.mxu0
      %465 = vdwg.mxu0
      %466 = vst.msk [vmem:[%s165] sm:$0xff] %vm325, %v448
      %467 = vst.msk [vmem:[%s165 + $0x8] sm:$0xff] %vm325, %v453
      %468 = vst.msk [vmem:[%s165 + $0x10] sm:$0xff] %vm325, %v458
      %469 = vst.msk [vmem:[%s165 + $0x18] sm:$0xff] %vm325, %v463
      %s470 = smul.u32 4, %s18
      %p471 = scmp.lt.s32.totalorder %s17, 1
      %s472 = scalar_select %p471, %s17, 1
      %p473 = scmp.lt.s32.totalorder %s470, 7
      %s474 = scalar_select %p473, %s470, 7
      %s475 = smul.addr %s472, 8
      %s476 = sadd.s32 %s474, %s475
      %s477 = smul.addr %s476, 8
      %s478 = scalar_lea.vmem %s2, %s477
      // Predicated region
      $region29: #{downsample_forward.1} parent=27 // pred_check
        %p479 = pneg %p92
      $region30: #{downsample_forward.1} parent=27 // pred_check_branch
        %481 = sbr.rel (%p479) target = $region32
      $region31: #{downsample_forward.1} parent=27 // pred_region
        %s482 = smul.u32 4, %s18
      $region32: #{downsample_forward.1} parent=27 // pred_fallthru
        _
    $region28: #{downsample_forward.1} parent=5 // pred_fallthru
      _
    %p483 = scmp.le.s32.totalorder 2, %s8
    // Predicated region
    $region33: #{downsample_forward.1} parent=5 // pred_check
      %p484 = pneg %p483
    $region34: #{downsample_forward.1} parent=5 // pred_check_branch
      %486 = sbr.rel (%p484) target = $region36
    $region35: #{downsample_forward.1} parent=5 // pred_region
      %s487 = ssub.s32 %s8, 2
      // Predicated region
      $region37: #{downsample_forward.1} parent=35 // pred_check
        %p488 = pneg %p98
      $region38: #{downsample_forward.1} parent=35 // pred_check_branch
        %490 = sbr.rel (%p488) target = $region40
      $region39: #{downsample_forward.1} parent=35 // pred_region
        %s491 = smul.u32 4, %s20
        %p492 = scmp.lt.s32.totalorder %s19, 1
        %s493 = scalar_select %p492, %s19, 1
        %p494 = scmp.lt.s32.totalorder %s491, 7
        %s495 = scalar_select %p494, %s491, 7
        %s496 = smul.addr %s493, 8
        %s497 = sadd.s32 %s495, %s496
        %s498 = smul.addr %s497, 8
        %s499 = scalar_lea.vmem %s2, %s498
      $region40: #{downsample_forward.1} parent=35 // pred_fallthru
        _
    $region36: #{downsample_forward.1} parent=5 // pred_fallthru
      _
  $region6: #{downsample_forward.1} parent=0 // loop_footer
    %s12 = sadd.s32 1, %s8
  $region7: #{downsample_forward.1} parent=0 // loop_footer_branch
    %7 = sbr.rel target = $region3
  $region8: #{downsample_forward.1} parent=0 // loop_exit
    _

</llo_original>
